<compile_context>
chip_gen: v7x
topology: tpu7x:2x2x1
jax: 0.10.0
libtpu: 0.0.40
codegen_flags: <defaults>
</compile_context>

<pallas_src>
import functools

import jax
import jax.numpy as jnp
from jax.experimental import pallas as pl
from jax.experimental.pallas import tpu as pltpu


def _pwce_kernel(x_ref, t_ref, w_ref, cw_ref, out_ref, acc_ref, *, num_classes, inv_denom):
    i = pl.program_id(1)

    @pl.when(i == 0)
    def _():
        acc_ref[...] = jnp.zeros_like(acc_ref)

    t = t_ref[...]                                          # (N, tR, 128) int32

    # Class-axis max as elementwise maxes over C slabs (no sublane reduce).
    m = x_ref[:, 0, :, :].astype(jnp.float32)               # (N, tR, 128)
    for c in range(1, num_classes):
        m = jnp.maximum(m, x_ref[:, c, :, :].astype(jnp.float32))

    # Exp-sum plus selection of the target-class logit and (class_weight * pixel_weight).
    s = jnp.zeros_like(m)
    x_t = jnp.zeros_like(m)
    ww_t = jnp.zeros_like(m)
    for c in range(num_classes):
        x_c = x_ref[:, c, :, :].astype(jnp.float32)         # (N, tR, 128)
        s = s + jnp.exp(x_c - m)
        sel = t == c                                        # C unrolled compares, no iota
        x_t = jnp.where(sel, x_c, x_t)
        # Pixel weights are indexed by the CLASS channel (PyTorch expand_as with N == C).
        ww_c = cw_ref[c] * w_ref[c].astype(jnp.float32)     # (tR, 128)
        ww_t = jnp.where(sel, ww_c[None], ww_t)

    # -ww_t * logp_t, accumulated per lane position in VMEM (single scalar collapse at the end).
    acc_ref[...] += ww_t * (m + jnp.log(s) - x_t)

    @pl.when(i == pl.num_programs(1) - 1)
    def _():
        partial = jnp.sum(acc_ref[...]) * inv_denom
        out_ref[...] = jnp.broadcast_to(partial, out_ref.shape)


def pixelwise_cross_entropy_loss(logits, target, weights, class_weights=None, *, tile_r=None):
    """logits: (N, C, D, H, W); target, weights: (N, D, H, W); class_weights: (C,) or None."""
    N, C, D, H, W = logits.shape
    assert N == C, "PyTorch's weights.unsqueeze(0).expand_as(input) requires batch == channels"
    assert target.shape == weights.shape == (N, D, H, W)
    P = D * H * W
    LANE = 128

    # Pixels -> lane-dense (R, 128) grid; R rounded up to a multiple of 16 so the pixel blocks
    # always split evenly across two TensorCores.  Padded pixels get zero weight -> contribute 0.
    R = pl.cdiv(P, LANE)
    R = pl.cdiv(R, 16) * 16
    P_pad = R * LANE

    x = logits.reshape(N, C, P)                    # keep HBM dtype (bf16 passthrough OK)
    t = target.reshape(N, P).astype(jnp.int32)
    w = weights.reshape(N, P)                      # keep HBM dtype
    if P_pad != P:
        pad = P_pad - P
        x = jnp.pad(x, ((0, 0), (0, 0), (0, pad)))
        t = jnp.pad(t, ((0, 0), (0, pad)))
        w = jnp.pad(w, ((0, 0), (0, pad)))
    x = x.reshape(N, C, R, LANE)
    t = t.reshape(N, R, LANE)
    w = w.reshape(N, R, LANE)

    if class_weights is None:
        class_weights = jnp.ones((C,), jnp.float32)
    cw = jnp.broadcast_to(class_weights.astype(jnp.float32).reshape(C, 1), (C, LANE))

    x_bytes = jnp.dtype(x.dtype).itemsize
    w_bytes = jnp.dtype(w.dtype).itemsize
    t_bytes = 4

    def step_bytes(tr):                            # input DMA bytes per grid step
        return tr * LANE * (N * C * x_bytes + N * (t_bytes + w_bytes))

    def vmem_use(tr):                              # pipeline bufs + acc + internal f32 temps
        blk = tr * LANE
        inputs = 2 * step_bytes(tr)                          # double-buffered input blocks
        acc = N * blk * 4                                     # f32 accumulator scratch
        internal = N * C * blk * 4 + 8 * N * blk * 4          # f32 upcast + per-class temps
        return inputs + acc + internal + 2 * C * LANE * 4

    # Generation-aware budgets: v7x has 64 MiB VMEM/TC and ~1.6 TB/s HBM per TC (overhead bites
    # sooner), so >=4 MiB steps within a ~36 MiB budget; v5e/v6e have 128 MiB VMEM -> go bigger.
    try:
        vmem_cap = int(pltpu.get_tpu_info().vmem_capacity_bytes)
    except Exception:
        vmem_cap = 64 << 20
    if vmem_cap <= (64 << 20):
        step_target, vmem_budget, vmem_cap_limit = 4 << 20, 36 << 20, 40 << 20
    else:
        step_target, vmem_budget, vmem_cap_limit = 8 << 20, 64 << 20, 96 << 20

    half = R // 2                                  # pixel blocks per split (multiple of 8)
    if tile_r is None:
        k = half // 8
        cands = [8 * d for d in range(1, k + 1) if k % d == 0]   # multiples of 8 dividing half
        fit = [c for c in cands if vmem_use(c) <= vmem_budget]
        if not fit:
            raise ValueError("no pixel tile fits the VMEM budget; reduce batch/class count")
        pref = [c for c in fit if step_bytes(c) <= step_target]
        tile_r = max(pref) if pref else min(fit)
        # Keep >= 4 steps per core when the problem is big enough (fills the 2-deep pipeline).
        if half // tile_r < 4:
            deeper = [c for c in fit if c <= half // 4 and step_bytes(c) >= (1 << 20)]
            if deeper:
                tile_r = max(deeper)
    assert half % tile_r == 0 and tile_r % 8 == 0

    S = 2                                          # both v7x TensorCores always get work
    T = half // tile_r
    inv_denom = 1.0 / float(N * C * P)             # mean over the UNpadded element count

    vmem_limit = min(vmem_cap_limit, vmem_use(tile_r) + (4 << 20))
    vmem_limit = max(vmem_limit, 16 << 20)         # v5e scoped default is only 16 MiB

    kernel = functools.partial(_pwce_kernel, num_classes=C, inv_denom=inv_denom)

    out = pl.pallas_call(
        kernel,
        out_shape=jax.ShapeDtypeStruct((S, 8, LANE), jnp.float32),
        grid=(S, T),
        in_specs=[
            pl.BlockSpec((N, C, tile_r, LANE), lambda s, i: (0, 0, s * T + i, 0)),   # logits
            pl.BlockSpec((N, tile_r, LANE), lambda s, i: (0, s * T + i, 0)),         # targets
            pl.BlockSpec((N, tile_r, LANE), lambda s, i: (0, s * T + i, 0)),         # pixel weights
            pl.BlockSpec((C, LANE), lambda s, i: (0, 0)),                            # class weights
        ],
        out_specs=pl.BlockSpec((1, 8, LANE), lambda s, i: (s, 0, 0)),
        scratch_shapes=[pltpu.VMEM((N, tile_r, LANE), jnp.float32)],
        compiler_params=pltpu.CompilerParams(
            dimension_semantics=("parallel", "arbitrary"),
            vmem_limit_bytes=int(vmem_limit),
        ),
    )(x, t, w, cw)

    return jnp.sum(out[:, 0, 0])


if __name__ == "__main__":
    key = jax.random.PRNGKey(0)
    N = C = 4
    keys = jax.random.split(key, 6)
    class_weights = jnp.linspace(0.5, 2.0, C, dtype=jnp.float32)

    def reference(lg, tg, wt, cwv):
        lg = lg.astype(jnp.float32)
        logp = jax.nn.log_softmax(lg, axis=1)
        onehot = jax.nn.one_hot(tg, lg.shape[1], axis=1, dtype=jnp.float32)
        w_exp = jnp.broadcast_to(wt.astype(jnp.float32)[None], lg.shape)  # unsqueeze(0).expand_as
        cw_b = cwv.reshape(1, -1, 1, 1, 1)
        return jnp.mean(-cw_b * w_exp * onehot * logp)

    # Case 1: P = 1024 (R=8 -> padded to 16); exercises the pad path + auto tiling, grid (2, 1).
    D1, H1, W1 = 8, 8, 16
    lg1 = jax.random.normal(keys[0], (N, C, D1, H1, W1), jnp.float32)
    tg1 = jax.random.randint(keys[1], (N, D1, H1, W1), 0, C)
    wt1 = jax.random.uniform(keys[2], (N, D1, H1, W1), jnp.float32)
    loss1 = pixelwise_cross_entropy_loss(lg1, tg1, wt1, class_weights)
    jax.block_until_ready(loss1)
    ref1 = reference(lg1, tg1, wt1, class_weights)
    assert jnp.allclose(loss1, ref1, rtol=1e-5, atol=1e-6), (float(loss1), float(ref1))

    # Case 2: P = 4096 (R=32, no pad), explicit tile_r=8 -> grid (S=2, T=2): multi-step accumulate.
    D2, H2, W2 = 16, 16, 16
    lg2 = jax.random.normal(keys[3], (N, C, D2, H2, W2), jnp.float32)
    tg2 = jax.random.randint(keys[4], (N, D2, H2, W2), 0, C)
    wt2 = jax.random.uniform(keys[5], (N, D2, H2, W2), jnp.float32)
    loss2 = pixelwise_cross_entropy_loss(lg2, tg2, wt2, class_weights, tile_r=8)
    jax.block_until_ready(loss2)
    ref2 = reference(lg2, tg2, wt2, class_weights)
    assert jnp.allclose(loss2, ref2, rtol=1e-5, atol=1e-6), (float(loss2), float(ref2))

    # Case 3: bf16 logits/weights stay bf16 in HBM (half the DMA bytes), upcast in-kernel;
    # also exercises the class_weights=None path and auto tiling.
    lg3 = lg2.astype(jnp.bfloat16)
    wt3 = wt2.astype(jnp.bfloat16)
    loss3 = pixelwise_cross_entropy_loss(lg3, tg2, wt3, None)
    jax.block_until_ready(loss3)
    ref3 = reference(lg3, tg2, wt3, jnp.ones((C,), jnp.float32))
    assert jnp.allclose(loss3, ref3, rtol=1e-4, atol=1e-5), (float(loss3), float(ref3))

    print("KERNEL_OK")
</pallas_src>

<mosaic_0001>
module attributes {stable_mosaic.version = 11 : i64} {
  func.func @_pwce_kernel(%arg0: i32, %arg1: i32, %arg2: memref<4x4x8x128xf32, #tpu.memory_space<vmem>>, %arg3: memref<4x8x128xi32, #tpu.memory_space<vmem>>, %arg4: memref<4x8x128xf32, #tpu.memory_space<vmem>>, %arg5: memref<4x128xf32, #tpu.memory_space<vmem>>, %arg6: memref<1x8x128xf32, #tpu.memory_space<vmem>>, %arg7: memref<4x8x128xf32, #tpu.memory_space<vmem>>) attributes {dimension_semantics = [#tpu.dimension_semantics<parallel>, #tpu.dimension_semantics<arbitrary>], iteration_bounds = array<i64: 2, 1>, scalar_prefetch = 0 : i64, scratch_operands = 1 : i64, tpu.core_type = #tpu.core_type<tc>, window_params = [{transform_indices = @transform_0, window_bounds = array<i64: 4, 4, 8, 128>}, {transform_indices = @transform_1, window_bounds = array<i64: 4, 8, 128>}, {transform_indices = @transform_2, window_bounds = array<i64: 4, 8, 128>}, {pipeline_mode = #tpu.pipeline_mode<synchronous>, transform_indices = @transform_3, window_bounds = array<i64: 4, 128>}, {transform_indices = @transform_4, window_bounds = array<i64: 1, 8, 128>}]} {
    %c0_i32 = arith.constant 0 : i32
    %0 = arith.cmpi eq, %arg1, %c0_i32 : i32
    %1 = arith.extui %0 : i1 to i32
    %c0_i32_0 = arith.constant 0 : i32
    %2 = arith.cmpi ne, %1, %c0_i32_0 : i32
    scf.if %2 {
      %cst_63 = arith.constant 0.000000e+00 : f32
      %104 = vector.broadcast %cst_63 : f32 to vector<4x8x128xf32>
      %c0_64 = arith.constant 0 : index
      %c0_65 = arith.constant 0 : index
      %c0_66 = arith.constant 0 : index
      %105 = vector.load %arg7[%c0_64, %c0_65, %c0_66] : memref<4x8x128xf32, #tpu.memory_space<vmem>>, vector<4x8x128xf32>
      tpu.vector_store %arg7[%c0_64, %c0_65, %c0_66], %104 {strides = array<i32>} : memref<4x8x128xf32, #tpu.memory_space<vmem>>, vector<4x8x128xf32>,
    } else {
    }
    %c0 = arith.constant 0 : index
    %c0_1 = arith.constant 0 : index
    %c0_2 = arith.constant 0 : index
    %3 = vector.load %arg3[%c0, %c0_1, %c0_2] : memref<4x8x128xi32, #tpu.memory_space<vmem>>, vector<4x8x128xi32>
    %c0_3 = arith.constant 0 : index
    %c0_4 = arith.constant 0 : index
    %c0_5 = arith.constant 0 : index
    %c0_6 = arith.constant 0 : index
    %4 = vector.load %arg2[%c0_3, %c0_4, %c0_5, %c0_6] : memref<4x4x8x128xf32, #tpu.memory_space<vmem>>, vector<4x1x8x128xf32>
    %5 = vector.shape_cast %4 : vector<4x1x8x128xf32> to vector<4x8x128xf32>
    %c0_7 = arith.constant 0 : index
    %c1 = arith.constant 1 : index
    %c0_8 = arith.constant 0 : index
    %c0_9 = arith.constant 0 : index
    %6 = vector.load %arg2[%c0_7, %c1, %c0_8, %c0_9] : memref<4x4x8x128xf32, #tpu.memory_space<vmem>>, vector<4x1x8x128xf32>
    %7 = vector.shape_cast %6 : vector<4x1x8x128xf32> to vector<4x8x128xf32>
    %8 = arith.maximumf %5, %7 : vector<4x8x128xf32>
    %c0_10 = arith.constant 0 : index
    %c2 = arith.constant 2 : index
    %c0_11 = arith.constant 0 : index
    %c0_12 = arith.constant 0 : index
    %9 = vector.load %arg2[%c0_10, %c2, %c0_11, %c0_12] : memref<4x4x8x128xf32, #tpu.memory_space<vmem>>, vector<4x1x8x128xf32>
    %10 = vector.shape_cast %9 : vector<4x1x8x128xf32> to vector<4x8x128xf32>
    %11 = arith.maximumf %8, %10 : vector<4x8x128xf32>
    %c0_13 = arith.constant 0 : index
    %c3 = arith.constant 3 : index
    %c0_14 = arith.constant 0 : index
    %c0_15 = arith.constant 0 : index
    %12 = vector.load %arg2[%c0_13, %c3, %c0_14, %c0_15] : memref<4x4x8x128xf32, #tpu.memory_space<vmem>>, vector<4x1x8x128xf32>
    %13 = vector.shape_cast %12 : vector<4x1x8x128xf32> to vector<4x8x128xf32>
    %14 = arith.maximumf %11, %13 : vector<4x8x128xf32>
    %cst = arith.constant 0.000000e+00 : f32
    %15 = vector.broadcast %cst : f32 to vector<4x8x128xf32>
    %cst_16 = arith.constant 0.000000e+00 : f32
    %16 = vector.broadcast %cst_16 : f32 to vector<4x8x128xf32>
    %cst_17 = arith.constant 0.000000e+00 : f32
    %17 = vector.broadcast %cst_17 : f32 to vector<4x8x128xf32>
    %c0_18 = arith.constant 0 : index
    %c0_19 = arith.constant 0 : index
    %c0_20 = arith.constant 0 : index
    %c0_21 = arith.constant 0 : index
    %18 = vector.load %arg2[%c0_18, %c0_19, %c0_20, %c0_21] : memref<4x4x8x128xf32, #tpu.memory_space<vmem>>, vector<4x1x8x128xf32>
    %19 = vector.shape_cast %18 : vector<4x1x8x128xf32> to vector<4x8x128xf32>
    %20 = arith.subf %19, %14 : vector<4x8x128xf32>
    %21 = math.exp %20 : vector<4x8x128xf32>
    %22 = arith.addf %15, %21 : vector<4x8x128xf32>
    %c0_i32_22 = arith.constant 0 : i32
    %23 = vector.broadcast %c0_i32_22 : i32 to vector<4x8x128xi32>
    %24 = arith.cmpi eq, %3, %23 : vector<4x8x128xi32>
    %25 = arith.select %24, %19, %16 : vector<4x8x128xi1>, vector<4x8x128xf32>
    %c0_23 = arith.constant 0 : index
    %c0_24 = arith.constant 0 : index
    %26 = vector.load %arg5[%c0_23, %c0_24] : memref<4x128xf32, #tpu.memory_space<vmem>>, vector<1x128xf32>
    %27 = vector.shape_cast %26 : vector<1x128xf32> to vector<128xf32>
    %c0_25 = arith.constant 0 : index
    %c0_26 = arith.constant 0 : index
    %c0_27 = arith.constant 0 : index
    %28 = vector.load %arg4[%c0_25, %c0_26, %c0_27] : memref<4x8x128xf32, #tpu.memory_space<vmem>>, vector<1x8x128xf32>
    %29 = vector.shape_cast %28 : vector<1x8x128xf32> to vector<8x128xf32>
    %30 = vector.shape_cast %27 : vector<128xf32> to vector<1x128xf32>
    %31 = vector.broadcast %30 : vector<1x128xf32> to vector<8x128xf32>
    %32 = arith.mulf %31, %29 : vector<8x128xf32>
    %33 = vector.shape_cast %32 : vector<8x128xf32> to vector<1x8x128xf32>
    %34 = vector.shape_cast %33 : vector<1x8x128xf32> to vector<1x8x128xf32>
    %35 = vector.broadcast %34 : vector<1x8x128xf32> to vector<4x8x128xf32>
    %36 = arith.select %24, %35, %17 : vector<4x8x128xi1>, vector<4x8x128xf32>
    %c0_28 = arith.constant 0 : index
    %c1_29 = arith.constant 1 : index
    %c0_30 = arith.constant 0 : index
    %c0_31 = arith.constant 0 : index
    %37 = vector.load %arg2[%c0_28, %c1_29, %c0_30, %c0_31] : memref<4x4x8x128xf32, #tpu.memory_space<vmem>>, vector<4x1x8x128xf32>
    %38 = vector.shape_cast %37 : vector<4x1x8x128xf32> to vector<4x8x128xf32>
    %39 = arith.subf %38, %14 : vector<4x8x128xf32>
    %40 = math.exp %39 : vector<4x8x128xf32>
    %41 = arith.addf %22, %40 : vector<4x8x128xf32>
    %c1_i32 = arith.constant 1 : i32
    %42 = vector.broadcast %c1_i32 : i32 to vector<4x8x128xi32>
    %43 = arith.cmpi eq, %3, %42 : vector<4x8x128xi32>
    %44 = arith.select %43, %38, %25 : vector<4x8x128xi1>, vector<4x8x128xf32>
    %c1_32 = arith.constant 1 : index
    %c0_33 = arith.constant 0 : index
    %45 = vector.load %arg5[%c1_32, %c0_33] : memref<4x128xf32, #tpu.memory_space<vmem>>, vector<1x128xf32>
    %46 = vector.shape_cast %45 : vector<1x128xf32> to vector<128xf32>
    %c1_34 = arith.constant 1 : index
    %c0_35 = arith.constant 0 : index
    %c0_36 = arith.constant 0 : index
    %47 = vector.load %arg4[%c1_34, %c0_35, %c0_36] : memref<4x8x128xf32, #tpu.memory_space<vmem>>, vector<1x8x128xf32>
    %48 = vector.shape_cast %47 : vector<1x8x128xf32> to vector<8x128xf32>
    %49 = vector.shape_cast %46 : vector<128xf32> to vector<1x128xf32>
    %50 = vector.broadcast %49 : vector<1x128xf32> to vector<8x128xf32>
    %51 = arith.mulf %50, %48 : vector<8x128xf32>
    %52 = vector.shape_cast %51 : vector<8x128xf32> to vector<1x8x128xf32>
    %53 = vector.shape_cast %52 : vector<1x8x128xf32> to vector<1x8x128xf32>
    %54 = vector.broadcast %53 : vector<1x8x128xf32> to vector<4x8x128xf32>
    %55 = arith.select %43, %54, %36 : vector<4x8x128xi1>, vector<4x8x128xf32>
    %c0_37 = arith.constant 0 : index
    %c2_38 = arith.constant 2 : index
    %c0_39 = arith.constant 0 : index
    %c0_40 = arith.constant 0 : index
    %56 = vector.load %arg2[%c0_37, %c2_38, %c0_39, %c0_40] : memref<4x4x8x128xf32, #tpu.memory_space<vmem>>, vector<4x1x8x128xf32>
    %57 = vector.shape_cast %56 : vector<4x1x8x128xf32> to vector<4x8x128xf32>
    %58 = arith.subf %57, %14 : vector<4x8x128xf32>
    %59 = math.exp %58 : vector<4x8x128xf32>
    %60 = arith.addf %41, %59 : vector<4x8x128xf32>
    %c2_i32 = arith.constant 2 : i32
    %61 = vector.broadcast %c2_i32 : i32 to vector<4x8x128xi32>
    %62 = arith.cmpi eq, %3, %61 : vector<4x8x128xi32>
    %63 = arith.select %62, %57, %44 : vector<4x8x128xi1>, vector<4x8x128xf32>
    %c2_41 = arith.constant 2 : index
    %c0_42 = arith.constant 0 : index
    %64 = vector.load %arg5[%c2_41, %c0_42] : memref<4x128xf32, #tpu.memory_space<vmem>>, vector<1x128xf32>
    %65 = vector.shape_cast %64 : vector<1x128xf32> to vector<128xf32>
    %c2_43 = arith.constant 2 : index
    %c0_44 = arith.constant 0 : index
    %c0_45 = arith.constant 0 : index
    %66 = vector.load %arg4[%c2_43, %c0_44, %c0_45] : memref<4x8x128xf32, #tpu.memory_space<vmem>>, vector<1x8x128xf32>
    %67 = vector.shape_cast %66 : vector<1x8x128xf32> to vector<8x128xf32>
    %68 = vector.shape_cast %65 : vector<128xf32> to vector<1x128xf32>
    %69 = vector.broadcast %68 : vector<1x128xf32> to vector<8x128xf32>
    %70 = arith.mulf %69, %67 : vector<8x128xf32>
    %71 = vector.shape_cast %70 : vector<8x128xf32> to vector<1x8x128xf32>
    %72 = vector.shape_cast %71 : vector<1x8x128xf32> to vector<1x8x128xf32>
    %73 = vector.broadcast %72 : vector<1x8x128xf32> to vector<4x8x128xf32>
    %74 = arith.select %62, %73, %55 : vector<4x8x128xi1>, vector<4x8x128xf32>
    %c0_46 = arith.constant 0 : index
    %c3_47 = arith.constant 3 : index
    %c0_48 = arith.constant 0 : index
    %c0_49 = arith.constant 0 : index
    %75 = vector.load %arg2[%c0_46, %c3_47, %c0_48, %c0_49] : memref<4x4x8x128xf32, #tpu.memory_space<vmem>>, vector<4x1x8x128xf32>
    %76 = vector.shape_cast %75 : vector<4x1x8x128xf32> to vector<4x8x128xf32>
    %77 = arith.subf %76, %14 : vector<4x8x128xf32>
    %78 = math.exp %77 : vector<4x8x128xf32>
    %79 = arith.addf %60, %78 : vector<4x8x128xf32>
    %c3_i32 = arith.constant 3 : i32
    %80 = vector.broadcast %c3_i32 : i32 to vector<4x8x128xi32>
    %81 = arith.cmpi eq, %3, %80 : vector<4x8x128xi32>
    %82 = arith.select %81, %76, %63 : vector<4x8x128xi1>, vector<4x8x128xf32>
    %c3_50 = arith.constant 3 : index
    %c0_51 = arith.constant 0 : index
    %83 = vector.load %arg5[%c3_50, %c0_51] : memref<4x128xf32, #tpu.memory_space<vmem>>, vector<1x128xf32>
    %84 = vector.shape_cast %83 : vector<1x128xf32> to vector<128xf32>
    %c3_52 = arith.constant 3 : index
    %c0_53 = arith.constant 0 : index
    %c0_54 = arith.constant 0 : index
    %85 = vector.load %arg4[%c3_52, %c0_53, %c0_54] : memref<4x8x128xf32, #tpu.memory_space<vmem>>, vector<1x8x128xf32>
    %86 = vector.shape_cast %85 : vector<1x8x128xf32> to vector<8x128xf32>
    %87 = vector.shape_cast %84 : vector<128xf32> to vector<1x128xf32>
    %88 = vector.broadcast %87 : vector<1x128xf32> to vector<8x128xf32>
    %89 = arith.mulf %88, %86 : vector<8x128xf32>
    %90 = vector.shape_cast %89 : vector<8x128xf32> to vector<1x8x128xf32>
    %91 = vector.shape_cast %90 : vector<1x8x128xf32> to vector<1x8x128xf32>
    %92 = vector.broadcast %91 : vector<1x8x128xf32> to vector<4x8x128xf32>
    %93 = arith.select %81, %92, %74 : vector<4x8x128xi1>, vector<4x8x128xf32>
    %c0_55 = arith.constant 0 : index
    %c0_56 = arith.constant 0 : index
    %c0_57 = arith.constant 0 : index
    %94 = vector.load %arg7[%c0_55, %c0_56, %c0_57] : memref<4x8x128xf32, #tpu.memory_space<vmem>>, vector<4x8x128xf32>
    %95 = math.log %79 : vector<4x8x128xf32>
    %96 = arith.addf %14, %95 : vector<4x8x128xf32>
    %97 = arith.subf %96, %82 : vector<4x8x128xf32>
    %98 = arith.mulf %93, %97 : vector<4x8x128xf32>
    %99 = arith.addf %94, %98 : vector<4x8x128xf32>
    %c0_58 = arith.constant 0 : index
    %c0_59 = arith.constant 0 : index
    %c0_60 = arith.constant 0 : index
    %100 = vector.load %arg7[%c0_58, %c0_59, %c0_60] : memref<4x8x128xf32, #tpu.memory_space<vmem>>, vector<4x8x128xf32>
    tpu.vector_store %arg7[%c0_58, %c0_59, %c0_60], %99 {strides = array<i32>} : memref<4x8x128xf32, #tpu.memory_space<vmem>>, vector<4x8x128xf32>,
    %c0_i32_61 = arith.constant 0 : i32
    %101 = arith.cmpi eq, %arg1, %c0_i32_61 : i32
    %102 = arith.extui %101 : i1 to i32
    %c0_i32_62 = arith.constant 0 : i32
    %103 = arith.cmpi ne, %102, %c0_i32_62 : i32
    scf.if %103 {
      %c0_63 = arith.constant 0 : index
      %c0_64 = arith.constant 0 : index
      %c0_65 = arith.constant 0 : index
      %104 = vector.load %arg7[%c0_63, %c0_64, %c0_65] : memref<4x8x128xf32, #tpu.memory_space<vmem>>, vector<4x8x128xf32>
      %105 = vector.shape_cast %104 : vector<4x8x128xf32> to vector<1x4x8x128xf32>
      %cst_66 = arith.constant dense<0.000000e+00> : vector<1xf32>
      %106 = vector.multi_reduction <add>, %105, %cst_66 [1, 2, 3] : vector<1x4x8x128xf32> to vector<1xf32>
      %107 = vector.shape_cast %106 : vector<1xf32> to vector<1x1x1x1xf32>
      %108 = vector.extract %107[0, 0, 0, 0] : f32 from vector<1x1x1x1xf32>
      %cst_67 = arith.constant 6.10351563E-5 : f32
      %109 = arith.mulf %108, %cst_67 : f32
      %110 = vector.broadcast %109 : f32 to vector<1x8x128xf32>
      %c0_68 = arith.constant 0 : index
      %c0_69 = arith.constant 0 : index
      %c0_70 = arith.constant 0 : index
      %111 = vector.load %arg6[%c0_68, %c0_69, %c0_70] : memref<1x8x128xf32, #tpu.memory_space<vmem>>, vector<1x8x128xf32>
      tpu.vector_store %arg6[%c0_68, %c0_69, %c0_70], %110 {strides = array<i32>} : memref<1x8x128xf32, #tpu.memory_space<vmem>>, vector<1x8x128xf32>,
    } else {
    }
    return
  }
  func.func @transform_0(%arg0: i32, %arg1: i32) -> (i32, i32, i32, i32) {
    %c1_i32 = arith.constant 1 : i32
    %0 = arith.muli %arg0, %c1_i32 : i32
    %1 = arith.addi %0, %arg1 : i32
    %c0_i32 = arith.constant 0 : i32
    %c0_i32_0 = arith.constant 0 : i32
    %c0_i32_1 = arith.constant 0 : i32
    %c0_i32_2 = arith.constant 0 : i32
    return %c0_i32, %c0_i32_0, %1, %c0_i32_1 : i32, i32, i32, i32
  }
  func.func @transform_1(%arg0: i32, %arg1: i32) -> (i32, i32, i32) {
    %c1_i32 = arith.constant 1 : i32
    %0 = arith.muli %arg0, %c1_i32 : i32
    %1 = arith.addi %0, %arg1 : i32
    %c0_i32 = arith.constant 0 : i32
    %c0_i32_0 = arith.constant 0 : i32
    %c0_i32_1 = arith.constant 0 : i32
    return %c0_i32, %1, %c0_i32_0 : i32, i32, i32
  }
  func.func @transform_2(%arg0: i32, %arg1: i32) -> (i32, i32, i32) {
    %c1_i32 = arith.constant 1 : i32
    %0 = arith.muli %arg0, %c1_i32 : i32
    %1 = arith.addi %0, %arg1 : i32
    %c0_i32 = arith.constant 0 : i32
    %c0_i32_0 = arith.constant 0 : i32
    %c0_i32_1 = arith.constant 0 : i32
    return %c0_i32, %1, %c0_i32_0 : i32, i32, i32
  }
  func.func @transform_3(%arg0: i32, %arg1: i32) -> (i32, i32) {
    %c0_i32 = arith.constant 0 : i32
    %c0_i32_0 = arith.constant 0 : i32
    %c0_i32_1 = arith.constant 0 : i32
    return %c0_i32, %c0_i32_0 : i32, i32
  }
  func.func @transform_4(%arg0: i32, %arg1: i32) -> (i32, i32, i32) {
    %c0_i32 = arith.constant 0 : i32
    %c0_i32_0 = arith.constant 0 : i32
    %c0_i32_1 = arith.constant 0 : i32
    return %arg0, %c0_i32, %c0_i32_0 : i32, i32, i32
  }
}

</mosaic_0001>

<llo_original>
// kernel: tpu_custom_call.1
$region0: #{tpu_custom_call.1}
  #allocation0 [shape = 'u32[]', space=smem, size = 0x4, offset = 0x4, fixed_abs, tag = 'smem constant byte address 0x4 - core index']
  #allocation1 [shape = 'u32[144,128]{1,0:T(1,128)}', space=vmem, size = 0x12000, scoped, tag = 'internal scratch']
  #allocation2 [shape = 'f32[4,8,128]{2,1,0:T(8,128)}', space=vmem, size = 0x4000, scoped, tag = 'scratch operand']
  %s0 = inlined_call_operand.hbm [shape: f32[4,4,16,128], index: 0, kind: input, shape index: {}]
  %s1 = inlined_call_operand.hbm [shape: s32[4,16,128], index: 1, kind: input, shape index: {}]
  %s2 = inlined_call_operand.hbm [shape: f32[4,16,128], index: 2, kind: input, shape index: {}]
  %s3 = inlined_call_operand.vmem [shape: f32[4,128], index: 3, kind: input, shape index: {}]
  %s4 = inlined_call_operand.hbm [shape: f32[2,8,128], index: 4, kind: output, shape index: {}]
  %s5 = sld [smem:[#allocation0]]
  $region69: #{tpu_custom_call.1} parent=0
    _
  %s7 = ssub.s32 1, %s5
  %s8 = scalar_select 0, %s7, %s5
  $region1: #{tpu_custom_call.1} parent=0
    #allocation3 [shape = 'u8[131072]{0}', space=vmem, size = 0x20000, scoped, tag = 'input window, operand 0']
    #allocation4 [shape = 's32[2]{0}', space=sflag, size = 0x8, scoped, tag = 'scoped memory for tpu_custom_call.1']
    #allocation5 [shape = 's32[2]{0}', space=sflag, size = 0x8, scoped, tag = 'scoped memory for tpu_custom_call.1']
    #allocation6 [shape = 'u8[32768]{0}', space=vmem, size = 0x8000, scoped, tag = 'input window, operand 1']
    #allocation7 [shape = 's32[2]{0}', space=sflag, size = 0x8, scoped, tag = 'scoped memory for tpu_custom_call.1']
    #allocation8 [shape = 'u8[32768]{0}', space=vmem, size = 0x8000, scoped, tag = 'input window, operand 2']
    #allocation9 [shape = 'u8[8192]{0}', space=vmem, size = 0x2000, scoped, tag = 'output window, operand 0']
    %9 = vsyncpa [#allocation4], 0
    %s10 = scalar_lea.sflag [#allocation4], 1
    %11 = vsyncpa %s10, 0
    %12 = vsyncpa [#allocation7], 0
    %s13 = scalar_lea.sflag [#allocation7], 1
    %14 = vsyncpa %s13, 0
    %15 = vsyncpa [#allocation5], 0
    %s16 = scalar_lea.sflag [#allocation5], 1
    %17 = vsyncpa %s16, 0
    loop: start=0, step=1, limit=4
    $region2: #{tpu_custom_call.1} parent=1 // loop_pre_header
      _
    $region3: #{tpu_custom_call.1} parent=1 // loop_header
      %s19 = sphi 0, %s23
      %p20 = scmp.ge.s32.totalorder %s19, 4
      %s26 = sphi 0, %s38
      %s27 = sphi 0, %s34
      %s28 = sphi 0, %s26
      %s29 = sphi 0, %s27
      %s30 = sphi 0, %s28
      %s31 = sphi 0, %s29
      %s43 = sphi 0, %s45
      %s46 = sphi 0, %s43
      %s47 = sphi 0, %s46
      %s63 = sphi 0, %s47
      %s71 = sphi 0, %s73
      %s74 = sphi 0, %s71
      %s75 = sphi 0, %s74
      %s91 = sphi 0, %s75
      %s99 = sphi 0, %s101
      %s102 = sphi 0, %s99
      %s103 = sphi 0, %s102
      %s119 = sphi 0, %s103
      %s123 = sphi 0, %s123
      %s125 = sphi 0, %s123
      %s126 = sphi 0, %s125
      %s140 = sphi 0, %s126
      %s146 = sphi 0, %s148
      %s149 = sphi 0, %s146
      %s150 = sphi 0, %s149
      %s166 = sphi 0, %s150
    $region4: #{tpu_custom_call.1} parent=1 // loop_header_branch
      %22 = sbr.rel (%p20) target = $region8
    $region5: #{tpu_custom_call.1} parent=1 // loop_body
      %s24 = ssub.s32 %s19, 1
      %s25 = ssub.s32 %s19, 2
      %s32 = sadd.s32 1, %s27
      %p33 = scmp.ge.s32.totalorder %s32, 1
      %s34 = scalar_select %p33, 0, %s32
      %s35 = sadd.s32 1, %s26
      %s36 = scalar_select %p33, %s35, %s26
      %p37 = scmp.ge.s32.totalorder %s36, 2
      %s38 = scalar_select %p37, 0, %s36
      %s39 = sadd.s32 %s26, %s27
      %s40 = sadd.s32 %s38, %s34
      %s41 = ssub.s32 %s39, %s40
      %p42 = scmp.eq.s32.totalorder %s41, 0
      %s44 = sadd.s32 %s43, 1
      %s45 = scalar_select %p42, %s43, %s44
      %p48 = pneg %p42
      %p49 = scmp.eq.s32.totalorder %s19, 1
      %p50 = por %p48, %p49
      %p51 = scmp.ne.s32.totalorder %s43, %s46
      %p52 = scmp.eq.s32.totalorder %s19, 0
      %p53 = por %p51, %p52
      %p54 = scmp.ne.s32.totalorder %s43, %s46
      %p55 = scmp.eq.s32.totalorder %s24, 1
      %p56 = por %p54, %p55
      %p57 = scmp.ne.s32.totalorder %s46, %s47
      %p58 = scmp.eq.s32.totalorder %s24, 0
      %p59 = por %p57, %p58
      %p60 = scmp.ne.s32.totalorder %s46, %s47
      %p61 = scmp.eq.s32.totalorder %s25, 1
      %p62 = por %p60, %p61
      %p64 = scmp.ne.s32.totalorder %s47, %s63
      %p65 = scmp.eq.s32.totalorder %s25, 0
      %p66 = por %p64, %p65
      %s67 = sadd.s32 %s26, %s27
      %s68 = sadd.s32 %s38, %s34
      %s69 = ssub.s32 %s67, %s68
      %p70 = scmp.eq.s32.totalorder %s69, 0
      %s72 = sadd.s32 %s71, 1
      %s73 = scalar_select %p70, %s71, %s72
      %p76 = pneg %p70
      %p77 = scmp.eq.s32.totalorder %s19, 1
      %p78 = por %p76, %p77
      %p79 = scmp.ne.s32.totalorder %s71, %s74
      %p80 = scmp.eq.s32.totalorder %s19, 0
      %p81 = por %p79, %p80
      %p82 = scmp.ne.s32.totalorder %s71, %s74
      %p83 = scmp.eq.s32.totalorder %s24, 1
      %p84 = por %p82, %p83
      %p85 = scmp.ne.s32.totalorder %s74, %s75
      %p86 = scmp.eq.s32.totalorder %s24, 0
      %p87 = por %p85, %p86
      %p88 = scmp.ne.s32.totalorder %s74, %s75
      %p89 = scmp.eq.s32.totalorder %s25, 1
      %p90 = por %p88, %p89
      %p92 = scmp.ne.s32.totalorder %s75, %s91
      %p93 = scmp.eq.s32.totalorder %s25, 0
      %p94 = por %p92, %p93
      %s95 = sadd.s32 %s26, %s27
      %s96 = sadd.s32 %s38, %s34
      %s97 = ssub.s32 %s95, %s96
      %p98 = scmp.eq.s32.totalorder %s97, 0
      %s100 = sadd.s32 %s99, 1
      %s101 = scalar_select %p98, %s99, %s100
      %p104 = pneg %p98
      %p105 = scmp.eq.s32.totalorder %s19, 1
      %p106 = por %p104, %p105
      %p107 = scmp.ne.s32.totalorder %s99, %s102
      %p108 = scmp.eq.s32.totalorder %s19, 0
      %p109 = por %p107, %p108
      %p110 = scmp.ne.s32.totalorder %s99, %s102
      %p111 = scmp.eq.s32.totalorder %s24, 1
      %p112 = por %p110, %p111
      %p113 = scmp.ne.s32.totalorder %s102, %s103
      %p114 = scmp.eq.s32.totalorder %s24, 0
      %p115 = por %p113, %p114
      %p116 = scmp.ne.s32.totalorder %s102, %s103
      %p117 = scmp.eq.s32.totalorder %s25, 1
      %p118 = por %p116, %p117
      %p120 = scmp.ne.s32.totalorder %s103, %s119
      %p121 = scmp.eq.s32.totalorder %s25, 0
      %p122 = por %p120, %p121
      %s124 = sadd.s32 %s123, 1
      %p127 = scmp.eq.s32.totalorder %s19, 1
      %p128 = scmp.ne.s32.totalorder %s123, %s125
      %p129 = scmp.eq.s32.totalorder %s19, 0
      %p130 = por %p128, %p129
      %p131 = scmp.ne.s32.totalorder %s123, %s125
      %p132 = scmp.eq.s32.totalorder %s24, 1
      %p133 = por %p131, %p132
      %p134 = scmp.ne.s32.totalorder %s125, %s126
      %p135 = scmp.eq.s32.totalorder %s24, 0
      %p136 = por %p134, %p135
      %p137 = scmp.ne.s32.totalorder %s125, %s126
      %p138 = scmp.eq.s32.totalorder %s25, 1
      %p139 = por %p137, %p138
      %p141 = scmp.ne.s32.totalorder %s126, %s140
      %p142 = scmp.eq.s32.totalorder %s25, 0
      %p143 = por %p141, %p142
      %s144 = ssub.s32 %s26, %s38
      %p145 = scmp.eq.s32.totalorder %s144, 0
      %s147 = sadd.s32 %s146, 1
      %s148 = scalar_select %p145, %s146, %s147
      %p151 = pneg %p145
      %p152 = scmp.eq.s32.totalorder %s19, 1
      %p153 = por %p151, %p152
      %p154 = scmp.ne.s32.totalorder %s146, %s149
      %p155 = scmp.eq.s32.totalorder %s19, 0
      %p156 = por %p154, %p155
      %p157 = scmp.ne.s32.totalorder %s146, %s149
      %p158 = scmp.eq.s32.totalorder %s24, 1
      %p159 = por %p157, %p158
      %p160 = scmp.ne.s32.totalorder %s149, %s150
      %p161 = scmp.eq.s32.totalorder %s24, 0
      %p162 = por %p160, %p161
      %p163 = scmp.ne.s32.totalorder %s149, %s150
      %p164 = scmp.eq.s32.totalorder %s25, 1
      %p165 = por %p163, %p164
      %p167 = scmp.ne.s32.totalorder %s150, %s166
      %p168 = scmp.eq.s32.totalorder %s25, 0
      %p169 = por %p167, %p168
      %p170 = scmp.le.s32.totalorder 1, %s19
      %p171 = scmp.lt.s32.totalorder %s19, 3
      %p172 = pnand %p170, %p171
      %p173 = pneg %p172
      // Predicated region
      $region9: #{tpu_custom_call.1} parent=5 // pred_check
        _
      $region10: #{tpu_custom_call.1} parent=5 // pred_check_branch
        %175 = sbr.rel (%p172) target = $region12
      $region11: #{tpu_custom_call.1} parent=5 // pred_region
        %s176 = ssub.s32 %s19, 1
        // Predicated region
        $region13: #{tpu_custom_call.1} parent=11 // pred_check
          %p177 = pneg %p136
        $region14: #{tpu_custom_call.1} parent=11 // pred_check_branch
          %179 = sbr.rel (%p177) target = $region16
        $region15: #{tpu_custom_call.1} parent=11 // pred_region
          _
        $region16: #{tpu_custom_call.1} parent=11 // pred_fallthru
          _
      $region12: #{tpu_custom_call.1} parent=5 // pred_fallthru
        _
      %p180 = scmp.lt.s32.totalorder %s19, 2
      // Predicated region
      $region17: #{tpu_custom_call.1} parent=5 // pred_check
        %p181 = pneg %p180
      $region18: #{tpu_custom_call.1} parent=5 // pred_check_branch
        %183 = sbr.rel (%p181) target = $region20
      $region19: #{tpu_custom_call.1} parent=5 // pred_region
        // Predicated region
        $region21: #{tpu_custom_call.1} parent=19 // pred_check
          %p184 = pneg %p53
        $region22: #{tpu_custom_call.1} parent=19 // pred_check_branch
          %186 = sbr.rel (%p184) target = $region24
        $region23: #{tpu_custom_call.1} parent=19 // pred_region
          %s187 = sand.u32 %s43, 1
          %s188 = scalar_lea.sflag [#allocation4], %s187
          %s189 = sand.u32 %s43, 1
          %s190 = smul.addr %s189, 128
          %s191 = scalar_lea.vmem [#allocation3], %s190
          %s192 = sadd.s32 %s26, %s27
          %s194 = ssub.s32 2048, 2048
          %195 = vsyncadd %s188, %s194
          %s196 = smul.addr %s192, 128
          %s197 = scalar_lea.hbm %s0, %s196
          %s198 = sshll.u32 %s191, 4
          %s199 = int_to_ptr.vmem [resolvable:$true] %s198
          %204 = dma.hbm_to_vmem [thread:$0]  %s197, 2048, %s199, %s188, 256, 128, 8
        $region24: #{tpu_custom_call.1} parent=19 // pred_fallthru
          _
        // Predicated region
        $region25: #{tpu_custom_call.1} parent=19 // pred_check
          %p205 = pneg %p81
        $region26: #{tpu_custom_call.1} parent=19 // pred_check_branch
          %207 = sbr.rel (%p205) target = $region28
        $region27: #{tpu_custom_call.1} parent=19 // pred_region
          %s208 = sand.u32 %s19, 1
          %s209 = scalar_lea.sflag [#allocation7], %s208
          %s210 = sand.u32 %s71, 1
          %s211 = smul.addr %s210, 32
          %s212 = scalar_lea.vmem [#allocation6], %s211
          %s213 = sadd.s32 %s26, %s27
          %s215 = ssub.s32 512, 512
          %216 = vsyncadd %s209, %s215
          %s217 = smul.addr %s213, 128
          %s218 = scalar_lea.hbm %s1, %s217
          %s219 = sshll.u32 %s212, 4
          %s220 = int_to_ptr.vmem [resolvable:$true] %s219
          %225 = dma.hbm_to_vmem [thread:$0]  %s218, 512, %s220, %s209, 256, 128, 8
        $region28: #{tpu_custom_call.1} parent=19 // pred_fallthru
          _
        // Predicated region
        $region29: #{tpu_custom_call.1} parent=19 // pred_check
          %p226 = pneg %p109
        $region30: #{tpu_custom_call.1} parent=19 // pred_check_branch
          %228 = sbr.rel (%p226) target = $region32
        $region31: #{tpu_custom_call.1} parent=19 // pred_region
          %s229 = sand.u32 %s19, 1
          %s230 = scalar_lea.sflag [#allocation7], %s229
          %s231 = sand.u32 %s99, 1
          %s232 = smul.addr %s231, 32
          %s233 = scalar_lea.vmem [#allocation8], %s232
          %s234 = sadd.s32 %s26, %s27
          %s236 = ssub.s32 512, 512
          %237 = vsyncadd %s230, %s236
          %s238 = smul.addr %s234, 128
          %s239 = scalar_lea.hbm %s2, %s238
          %s240 = sshll.u32 %s233, 4
          %s241 = int_to_ptr.vmem [resolvable:$true] %s240
          %246 = dma.hbm_to_vmem [thread:$0]  %s239, 512, %s241, %s230, 256, 128, 8
        $region32: #{tpu_custom_call.1} parent=19 // pred_fallthru
          _
      $region20: #{tpu_custom_call.1} parent=5 // pred_fallthru
        _
      %p247 = scmp.le.s32.totalorder 1, %s19
      %p248 = scmp.lt.s32.totalorder %s19, 3
      %p249 = pnand %p247, %p248
      %p250 = pneg %p249
      // Predicated region
      $region33: #{tpu_custom_call.1} parent=5 // pred_check
        _
      $region34: #{tpu_custom_call.1} parent=5 // pred_check_branch
        %252 = sbr.rel (%p249) target = $region36
      $region35: #{tpu_custom_call.1} parent=5 // pred_region
        %s253 = ssub.s32 %s19, 1
        %s254 = sand.u32 %s46, 1
        %s255 = scalar_lea.sflag [#allocation4], %s254
        %s256 = sand.u32 %s46, 1
        %s257 = smul.addr %s256, 128
        %s258 = scalar_lea.vmem [#allocation3], %s257
        // Predicated region
        $region37: #{tpu_custom_call.1} parent=35 // pred_check
          %p259 = pneg %p59
        $region38: #{tpu_custom_call.1} parent=35 // pred_check_branch
          %261 = sbr.rel (%p259) target = $region40
        $region39: #{tpu_custom_call.1} parent=35 // pred_region
          %262 = dma.done %s255, 2048
        $region40: #{tpu_custom_call.1} parent=35 // pred_fallthru
          _
        %s263 = sand.u32 %s24, 1
        %s264 = scalar_lea.sflag [#allocation7], %s263
        %s265 = sand.u32 %s74, 1
        %s266 = smul.addr %s265, 32
        %s267 = scalar_lea.vmem [#allocation6], %s266
        // Predicated region
        $region41: #{tpu_custom_call.1} parent=35 // pred_check
          %p268 = pneg %p87
        $region42: #{tpu_custom_call.1} parent=35 // pred_check_branch
          %270 = sbr.rel (%p268) target = $region44
        $region43: #{tpu_custom_call.1} parent=35 // pred_region
          %271 = dma.done %s264, 512
        $region44: #{tpu_custom_call.1} parent=35 // pred_fallthru
          _
        %s272 = sand.u32 %s24, 1
        %s273 = scalar_lea.sflag [#allocation7], %s272
        %s274 = sand.u32 %s102, 1
        %s275 = smul.addr %s274, 32
        %s276 = scalar_lea.vmem [#allocation8], %s275
        // Predicated region
        $region45: #{tpu_custom_call.1} parent=35 // pred_check
          %p277 = pneg %p115
        $region46: #{tpu_custom_call.1} parent=35 // pred_check_branch
          %279 = sbr.rel (%p277) target = $region48
        $region47: #{tpu_custom_call.1} parent=35 // pred_region
          %280 = dma.done %s273, 512
        $region48: #{tpu_custom_call.1} parent=35 // pred_fallthru
          _
        %s281 = sand.u32 %s46, 1
        %s282 = scalar_lea.sflag [#allocation4], %s281
        %s283 = sand.u32 %s46, 1
        %s284 = smul.addr %s283, 128
        %s285 = scalar_lea.vmem [#allocation3], %s284
        %p286 = pneg %p59
        %p287 = pneg %p56
        %s288 = sand.u32 %s24, 1
        %s289 = scalar_lea.sflag [#allocation7], %s288
        %s290 = sand.u32 %s74, 1
        %s291 = smul.addr %s290, 32
        %s292 = scalar_lea.vmem [#allocation6], %s291
        %p293 = pneg %p87
        %p294 = pneg %p84
        %s295 = sand.u32 %s24, 1
        %s296 = scalar_lea.sflag [#allocation7], %s295
        %s297 = sand.u32 %s102, 1
        %s298 = smul.addr %s297, 32
        %s299 = scalar_lea.vmem [#allocation8], %s298
        %p300 = pneg %p115
        %p301 = pneg %p112
        %p302 = pneg %p136
        %p303 = pneg %p133
        %p304 = pneg %p162
        %p305 = pneg %p159
        %s306 = sand.u32 %s149, 1
        %s307 = scalar_lea.sflag [#allocation5], %s306
        %s308 = sand.u32 %s149, 1
        %s309 = smul.addr %s308, 8
        %s310 = scalar_lea.vmem [#allocation9], %s309
        %s311 = sadd.s32 %s28, %s29
        %s312 = sadd.s32 %s28, %s29
        %s313 = sadd.s32 %s28, %s29
        %p314 = scmp.eq.s32.totalorder %s29, 0
        // Predicated region
        $region49: #{tpu_custom_call.1} parent=35 // pred_check
          %p315 = pneg %p314
        $region50: #{tpu_custom_call.1} parent=35 // pred_check_branch
          %317 = sbr.rel (%p315) target = $region52
        $region51: #{tpu_custom_call.1} parent=35 // pred_region
          %318 = vst [vmem:[#allocation2] sm:$0xff] 0.0
          %319 = vst [vmem:[#allocation2 + $0x8] sm:$0xff] 0.0
          %320 = vst [vmem:[#allocation2 + $0x10] sm:$0xff] 0.0
          %321 = vst [vmem:[#allocation2 + $0x18] sm:$0xff] 0.0
        $region52: #{tpu_custom_call.1} parent=35 // pred_fallthru
          _
        %v322 = vld [vmem:[%s267] sm:$0xff]
        %v323 = vld [vmem:[%s267 + $0x8] sm:$0xff]
        %v324 = vld [vmem:[%s267 + $0x10] sm:$0xff]
        %v325 = vld [vmem:[%s267 + $0x18] sm:$0xff]
        %v326 = vld [vmem:[%s258] sm:$0xff]
        %v327 = vld [vmem:[%s258 + $0x20] sm:$0xff]
        %v328 = vld [vmem:[%s258 + $0x40] sm:$0xff]
        %v329 = vld [vmem:[%s258 + $0x60] sm:$0xff]
        %s330 = scalar_lea.vmem %s258, 8 [#allocation3]
        %v331 = vld [vmem:[%s330] sm:$0xff]
        %v332 = vld [vmem:[%s330 + $0x20] sm:$0xff]
        %v333 = vld [vmem:[%s330 + $0x40] sm:$0xff]
        %v334 = vld [vmem:[%s330 + $0x60] sm:$0xff]
        %v335 = vmax.f32 %v326, %v331
        %v336 = vmax.f32 %v327, %v332
        %v337 = vmax.f32 %v328, %v333
        %v338 = vmax.f32 %v329, %v334
        %s339 = scalar_lea.vmem %s258, 16 [#allocation3]
        %v340 = vld [vmem:[%s339] sm:$0xff]
        %v341 = vld [vmem:[%s339 + $0x20] sm:$0xff]
        %v342 = vld [vmem:[%s339 + $0x40] sm:$0xff]
        %v343 = vld [vmem:[%s339 + $0x60] sm:$0xff]
        %v344 = vmax.f32 %v335, %v340
        %v345 = vmax.f32 %v336, %v341
        %v346 = vmax.f32 %v337, %v342
        %v347 = vmax.f32 %v338, %v343
        %s348 = scalar_lea.vmem %s258, 24 [#allocation3]
        %v349 = vld [vmem:[%s348] sm:$0xff]
        %v350 = vld [vmem:[%s348 + $0x20] sm:$0xff]
        %v351 = vld [vmem:[%s348 + $0x40] sm:$0xff]
        %v352 = vld [vmem:[%s348 + $0x60] sm:$0xff]
        %v353 = vmax.f32 %v344, %v349
        %v354 = vmax.f32 %v345, %v350
        %v355 = vmax.f32 %v346, %v351
        %v356 = vmax.f32 %v347, %v352
        %v357 = vsub.f32 %v326, %v353
        %v358 = vsub.f32 %v327, %v354
        %v359 = vsub.f32 %v328, %v355
        %v360 = vsub.f32 %v329, %v356
        %v361 = vmul.f32 %v357, 1.442695
        %v362 = vpow.pop %v361
        %v363 = vmul.f32 %v358, 1.442695
        %v364 = vpow.pop %v363
        %v365 = vmul.f32 %v359, 1.442695
        %v366 = vpow.pop %v365
        %v367 = vmul.f32 %v360, 1.442695
        %v368 = vpow.pop %v367
        %v369 = vadd.f32 %v362, 0.0
        %v370 = vadd.f32 %v364, 0.0
        %v371 = vadd.f32 %v366, 0.0
        %v372 = vadd.f32 %v368, 0.0
        %vm373 = vcmp.eq.s32.totalorder %v322, 0
        %vm374 = vcmp.eq.s32.totalorder %v323, 0
        %vm375 = vcmp.eq.s32.totalorder %v324, 0
        %vm376 = vcmp.eq.s32.totalorder %v325, 0
        %v377 = vsel %vm373, %v326, 0.0
        %v378 = vsel %vm374, %v327, 0.0
        %v379 = vsel %vm375, %v328, 0.0
        %v380 = vsel %vm376, %v329, 0.0
        %v381 = vld [vmem:[%s3] sm:$0x1]
        %v382 = vld [vmem:[%s276] sm:$0xff]
        %v383 = vlaneseq
        %v384 = vshrl.u32 %v383, 7
        %v385 = vsub.s32 0, %v384
        %v386 = vrot.slane %v381, %v385
        %v387 = vmul.f32 %v386, %v382
        %v388 = vsel %vm373, %v387, 0.0
        %v389 = vsel %vm374, %v387, 0.0
        %v390 = vsel %vm375, %v387, 0.0
        %v391 = vsel %vm376, %v387, 0.0
        %v392 = vsub.f32 %v331, %v353
        %v393 = vsub.f32 %v332, %v354
        %v394 = vsub.f32 %v333, %v355
        %v395 = vsub.f32 %v334, %v356
        %v396 = vmul.f32 %v392, 1.442695
        %v397 = vpow.pop %v396
        %v398 = vmul.f32 %v393, 1.442695
        %v399 = vpow.pop %v398
        %v400 = vmul.f32 %v394, 1.442695
        %v401 = vpow.pop %v400
        %v402 = vmul.f32 %v395, 1.442695
        %v403 = vpow.pop %v402
        %v404 = vadd.f32 %v369, %v397
        %v405 = vadd.f32 %v370, %v399
        %v406 = vadd.f32 %v371, %v401
        %v407 = vadd.f32 %v372, %v403
        %vm408 = vcmp.eq.s32.totalorder %v322, 1
        %vm409 = vcmp.eq.s32.totalorder %v323, 1
        %vm410 = vcmp.eq.s32.totalorder %v324, 1
        %vm411 = vcmp.eq.s32.totalorder %v325, 1
        %v412 = vsel %vm408, %v331, %v377
        %v413 = vsel %vm409, %v332, %v378
        %v414 = vsel %vm410, %v333, %v379
        %v415 = vsel %vm411, %v334, %v380
        %v416 = vld [vmem:[%s3 + $0x1] sm:$0x1]
        %s417 = scalar_lea.vmem %s276, 8 [#allocation8]
        %v418 = vld [vmem:[%s417] sm:$0xff]
        %v419 = vlaneseq
        %v420 = vshrl.u32 %v419, 7
        %v421 = vsub.s32 0, %v420
        %v422 = vrot.slane %v416, %v421
        %v423 = vmul.f32 %v422, %v418
        %v424 = vsel %vm408, %v423, %v388
        %v425 = vsel %vm409, %v423, %v389
        %v426 = vsel %vm410, %v423, %v390
        %v427 = vsel %vm411, %v423, %v391
        %v428 = vsub.f32 %v340, %v353
        %v429 = vsub.f32 %v341, %v354
        %v430 = vsub.f32 %v342, %v355
        %v431 = vsub.f32 %v343, %v356
        %v432 = vmul.f32 %v428, 1.442695
        %v433 = vpow.pop %v432
        %v434 = vmul.f32 %v429, 1.442695
        %v435 = vpow.pop %v434
        %v436 = vmul.f32 %v430, 1.442695
        %v437 = vpow.pop %v436
        %v438 = vmul.f32 %v431, 1.442695
        %v439 = vpow.pop %v438
        %v440 = vadd.f32 %v404, %v433
        %v441 = vadd.f32 %v405, %v435
        %v442 = vadd.f32 %v406, %v437
        %v443 = vadd.f32 %v407, %v439
        %vm444 = vcmp.eq.s32.totalorder %v322, 2
        %vm445 = vcmp.eq.s32.totalorder %v323, 2
        %vm446 = vcmp.eq.s32.totalorder %v324, 2
        %vm447 = vcmp.eq.s32.totalorder %v325, 2
        %v448 = vsel %vm444, %v340, %v412
        %v449 = vsel %vm445, %v341, %v413
        %v450 = vsel %vm446, %v342, %v414
        %v451 = vsel %vm447, %v343, %v415
        %v452 = vld [vmem:[%s3 + $0x2] sm:$0x1]
        %s453 = scalar_lea.vmem %s276, 16 [#allocation8]
        %v454 = vld [vmem:[%s453] sm:$0xff]
        %v455 = vlaneseq
        %v456 = vshrl.u32 %v455, 7
        %v457 = vsub.s32 0, %v456
        %v458 = vrot.slane %v452, %v457
        %v459 = vmul.f32 %v458, %v454
        %v460 = vsel %vm444, %v459, %v424
        %v461 = vsel %vm445, %v459, %v425
        %v462 = vsel %vm446, %v459, %v426
        %v463 = vsel %vm447, %v459, %v427
        %v464 = vsub.f32 %v349, %v353
        %v465 = vsub.f32 %v350, %v354
        %v466 = vsub.f32 %v351, %v355
        %v467 = vsub.f32 %v352, %v356
        %v468 = vmul.f32 %v464, 1.442695
        %v469 = vpow.pop %v468
        %v470 = vmul.f32 %v465, 1.442695
        %v471 = vpow.pop %v470
        %v472 = vmul.f32 %v466, 1.442695
        %v473 = vpow.pop %v472
        %v474 = vmul.f32 %v467, 1.442695
        %v475 = vpow.pop %v474
        %v476 = vadd.f32 %v440, %v469
        %v477 = vadd.f32 %v441, %v471
        %v478 = vadd.f32 %v442, %v473
        %v479 = vadd.f32 %v443, %v475
        %vm480 = vcmp.eq.s32.totalorder %v322, 3
        %vm481 = vcmp.eq.s32.totalorder %v323, 3
        %vm482 = vcmp.eq.s32.totalorder %v324, 3
        %vm483 = vcmp.eq.s32.totalorder %v325, 3
        %v484 = vsel %vm480, %v349, %v448
        %v485 = vsel %vm481, %v350, %v449
        %v486 = vsel %vm482, %v351, %v450
        %v487 = vsel %vm483, %v352, %v451
        %v488 = vld [vmem:[%s3 + $0x3] sm:$0x1]
        %s489 = scalar_lea.vmem %s276, 24 [#allocation8]
        %v490 = vld [vmem:[%s489] sm:$0xff]
        %v491 = vlaneseq
        %v492 = vshrl.u32 %v491, 7
        %v493 = vsub.s32 0, %v492
        %v494 = vrot.slane %v488, %v493
        %v495 = vmul.f32 %v494, %v490
        %v496 = vsel %vm480, %v495, %v460
        %v497 = vsel %vm481, %v495, %v461
        %v498 = vsel %vm482, %v495, %v462
        %v499 = vsel %vm483, %v495, %v463
        %v500 = vld [vmem:[#allocation2] sm:$0xff]
        %v501 = vld [vmem:[#allocation2 + $0x8] sm:$0xff]
        %v502 = vld [vmem:[#allocation2 + $0x10] sm:$0xff]
        %v503 = vld [vmem:[#allocation2 + $0x18] sm:$0xff]
        %v504 = vlog2.pop %v476
        %v505 = vmul.f32 %v504, 0.6931472
        %v506 = vlog2.pop %v477
        %v507 = vmul.f32 %v506, 0.6931472
        %v508 = vlog2.pop %v478
        %v509 = vmul.f32 %v508, 0.6931472
        %v510 = vlog2.pop %v479
        %v511 = vmul.f32 %v510, 0.6931472
        %v512 = vadd.f32 %v353, %v505
        %v513 = vadd.f32 %v354, %v507
        %v514 = vadd.f32 %v355, %v509
        %v515 = vadd.f32 %v356, %v511
        %v516 = vsub.f32 %v512, %v484
        %v517 = vsub.f32 %v513, %v485
        %v518 = vsub.f32 %v514, %v486
        %v519 = vsub.f32 %v515, %v487
        %v520 = vmul.f32 %v496, %v516
        %v521 = vmul.f32 %v497, %v517
        %v522 = vmul.f32 %v498, %v518
        %v523 = vmul.f32 %v499, %v519
        %v524 = vadd.f32 %v500, %v520
        %v525 = vadd.f32 %v501, %v521
        %v526 = vadd.f32 %v502, %v522
        %v527 = vadd.f32 %v503, %v523
        %528 = vst [vmem:[#allocation2] sm:$0xff] %v524
        %529 = vst [vmem:[#allocation2 + $0x8] sm:$0xff] %v525
        %530 = vst [vmem:[#allocation2 + $0x10] sm:$0xff] %v526
        %531 = vst [vmem:[#allocation2 + $0x18] sm:$0xff] %v527
        // Predicated region
        $region53: #{tpu_custom_call.1} parent=35 // pred_check
          %p532 = pneg %p314
        $region54: #{tpu_custom_call.1} parent=35 // pred_check_branch
          %534 = sbr.rel (%p532) target = $region56
        $region55: #{tpu_custom_call.1} parent=35 // pred_region
          %v535 = vld [vmem:[#allocation2] sm:$0xff]
          %v536 = vld [vmem:[#allocation2 + $0x8] sm:$0xff]
          %v537 = vld [vmem:[#allocation2 + $0x10] sm:$0xff]
          %v538 = vld [vmem:[#allocation2 + $0x18] sm:$0xff]
          %v539 = vadd.f32 %v535, %v536
          %v540 = vadd.f32 %v539, %v537
          %v541 = vadd.f32 %v540, %v538
          %542 = vadd.xlane.f32.xlu0 %v541
          %v543 = vpop.xlane.xlu0 %542
          %v544 = vrot.slane %v543, 4
          %v545 = vadd.f32 %v543, %v544
          %v546 = vrot.slane %v545, 2
          %v547 = vadd.f32 %v545, %v546
          %v548 = vrot.slane %v547, 1
          %v549 = vadd.f32 %v547, %v548
          %s550 = vtos %v549
          %s551 = smul.f32 %s550, 6.1035156e-05
          %v552 = vstv %s551
          %553 = vst [vmem:[%s310] sm:$0xff] %v552
        $region56: #{tpu_custom_call.1} parent=35 // pred_fallthru
          _
        %s554 = sand.u32 %s149, 1
        %s555 = scalar_lea.sflag [#allocation5], %s554
        %s556 = sand.u32 %s149, 1
        %s557 = smul.addr %s556, 8
        %s558 = scalar_lea.vmem [#allocation9], %s557
        // Predicated region
        $region57: #{tpu_custom_call.1} parent=35 // pred_check
          %p559 = pneg %p159
        $region58: #{tpu_custom_call.1} parent=35 // pred_check_branch
          %561 = sbr.rel (%p559) target = $region60
        $region59: #{tpu_custom_call.1} parent=35 // pred_region
          %s563 = ssub.s32 128, 128
          %564 = vsyncadd %s555, %s563
          %s565 = smul.addr %s28, 128
          %s566 = scalar_lea.hbm %s4, %s565
          %s568 = sshll.u32 %s558, 4
          %s569 = int_to_ptr.vmem [resolvable:$true] %s568
          %571 = dma.vmem_to_hbm [thread:$0]  %s569, 128, %s566, %s555
        $region60: #{tpu_custom_call.1} parent=35 // pred_fallthru
          _
      $region36: #{tpu_custom_call.1} parent=5 // pred_fallthru
        _
      %p572 = scmp.le.s32.totalorder 2, %s19
      // Predicated region
      $region61: #{tpu_custom_call.1} parent=5 // pred_check
        %p573 = pneg %p572
      $region62: #{tpu_custom_call.1} parent=5 // pred_check_branch
        %575 = sbr.rel (%p573) target = $region64
      $region63: #{tpu_custom_call.1} parent=5 // pred_region
        %s576 = ssub.s32 %s19, 2
        // Predicated region
        $region65: #{tpu_custom_call.1} parent=63 // pred_check
          %p577 = pneg %p165
        $region66: #{tpu_custom_call.1} parent=63 // pred_check_branch
          %579 = sbr.rel (%p577) target = $region68
        $region67: #{tpu_custom_call.1} parent=63 // pred_region
          %s580 = sand.u32 %s150, 1
          %s581 = scalar_lea.sflag [#allocation5], %s580
          %s582 = sand.u32 %s150, 1
          %s583 = smul.addr %s582, 8
          %s584 = scalar_lea.vmem [#allocation9], %s583
          %585 = dma.done %s581, 128
        $region68: #{tpu_custom_call.1} parent=63 // pred_fallthru
          _
      $region64: #{tpu_custom_call.1} parent=5 // pred_fallthru
        _
    $region6: #{tpu_custom_call.1} parent=1 // loop_footer
      %s23 = sadd.s32 1, %s19
    $region7: #{tpu_custom_call.1} parent=1 // loop_footer_branch
      %18 = sbr.rel target = $region3
    $region8: #{tpu_custom_call.1} parent=1 // loop_exit
      _
    %586 = vsyncpa [#allocation4], 1
    %s587 = scalar_lea.sflag [#allocation4], 1
    %588 = vsyncpa %s587, 1
    %589 = vsyncpa [#allocation7], 1
    %s590 = scalar_lea.sflag [#allocation7], 1
    %591 = vsyncpa %s590, 1
    %592 = vsyncpa [#allocation5], 1
    %s593 = scalar_lea.sflag [#allocation5], 1
    %594 = vsyncpa %s593, 1

</llo_original>
